<compile_context>
chip_gen: v7x
topology: tpu7x:2x2x1
jax: 0.10.0
libtpu: 0.0.40
codegen_flags: <defaults>
</compile_context>

<pallas_src>
import numpy as np
import jax
import jax.numpy as jnp
from jax.experimental import pallas as pl
from jax.experimental.pallas import tpu as pltpu


def _round_up(x: int, m: int) -> int:
    return ((x + m - 1) // m) * m


def _bilinear_matrix_np(out_size: int, in_size: int) -> np.ndarray:
    """Interpolation matrix M (out_size, in_size) with PyTorch align_corners=False,
    antialias=False semantics, so that out = M @ in reproduces F.interpolate('bilinear')."""
    scale = in_size / out_size
    o = np.arange(out_size)
    src = np.maximum((o + 0.5) * scale - 0.5, 0.0)
    i0 = np.minimum(np.floor(src).astype(np.int64), in_size - 1)
    i1 = np.minimum(i0 + 1, in_size - 1)
    w1 = src - i0
    w0 = 1.0 - w1
    m = np.zeros((out_size, in_size), np.float64)
    m[o, i0] += w0
    m[o, i1] += w1
    return m.astype(np.float32)


# ----------------------------------------------------------------------------- kernels

def _kron_kernel(x_ref, k_ref, o_ref):
    # x_ref: (T, H*W) lane-dense input; k_ref: (H*W, new_res^2) Kronecker operator;
    # o_ref: (T, new_res^2) lane-dense output.  Single MXU matmul, no relayouts.
    o_ref[...] = jnp.dot(x_ref[...], k_ref[...],
                         preferred_element_type=jnp.float32).astype(o_ref.dtype)


def _separable_kernel(x_ref, wct_ref, wrt_ref, o_ref):
    # x_ref  : (T, H, W)   T single-channel images
    # wct_ref: (W, P)      column interpolation matrix, pre-transposed (Wc^T)
    # wrt_ref: (H, O)      row interpolation matrix, pre-transposed (Wr^T)
    # o_ref  : (T, O*P)    lane-dense output slab
    T, H, W = x_ref.shape
    P = wct_ref.shape[1]
    O = wrt_ref.shape[1]

    x = x_ref[...]
    # Width pass: one big folded MXU matmul, M = T*H.
    tmp = jnp.dot(x.reshape(T * H, W), wct_ref[...],
                  preferred_element_type=jnp.float32).astype(x.dtype)   # (T*H, P)
    # Put the contraction dim (H) last (XLU transpose of the res_scaler^2-smaller
    # intermediate), then the height pass as a second folded matmul, M = T*P.
    tmp = jnp.swapaxes(tmp.reshape(T, H, P), 1, 2)                      # (T, P, H)
    out = jnp.dot(tmp.reshape(T * P, H), wrt_ref[...],
                  preferred_element_type=jnp.float32)                    # (T*P, O)
    # Reorder to (o, p) and flatten: all in VMEM (hidden under the HBM-bound DMA),
    # the HBM store itself is a dense, unmasked slab.
    out = jnp.swapaxes(out.reshape(T, P, O), 1, 2)                      # (T, O, P)
    o_ref[...] = out.reshape(T, O * P).astype(o_ref.dtype)


# ----------------------------------------------------------------------------- wrapper

_FALLBACK_VMEM_CAP = 64 * 1024 * 1024  # conservative (v7x) if the query is unavailable


def _vmem_capacity_bytes() -> int:
    try:
        return int(pltpu.get_tpu_info().vmem_capacity_bytes)
    except Exception:
        return _FALLBACK_VMEM_CAP


def _choose_block_images(N, per_image_bytes, fixed_bytes, budget, requested=None):
    """Largest divisor T of N (sublane-aligned: T % 8 == 0 or T == N) whose per-block VMEM
    footprint fits the budget, preferring an even block count (v7x has 2 TensorCores)."""
    divisors = [d for d in range(1, N + 1) if N % d == 0]
    aligned = [d for d in divisors if d % 8 == 0 or d == N]
    if requested is not None:
        ok = [d for d in aligned if d <= int(requested)]
        return max(ok) if ok else min(aligned)
    fitting = [d for d in aligned if fixed_bytes + d * per_image_bytes <= budget]
    if not fitting:
        # TODO(synk): row-tile the width pass (or split into two pallas_calls) for images so
        # large that even the smallest aligned block exceeds the VMEM budget (v7x, >=2k^2).
        return min(aligned)
    even = [d for d in fitting if (N // d) % 2 == 0]
    return max(even) if even else max(fitting)


def numerical_downsampling(x, res_scaler, *, block_images=None, force_path=None):
    """Equivalent of Numerical_downsampling.forward for (B, 4, H, W) inputs.

    Returns (out, None) with out: (B, C, new_res, new_res) float32,
    new_res = W // res_scaler (used for both spatial dims, like the PyTorch code)."""
    B, C, H, W = x.shape
    N = B * C
    new_res = W // res_scaler
    OP = new_res * new_res
    itemsize = x.dtype.itemsize
    w_dtype = jnp.bfloat16 if x.dtype == jnp.bfloat16 else jnp.float32
    w_itemsize = jnp.dtype(w_dtype).itemsize

    vmem_cap = _vmem_capacity_bytes()
    budget = int(vmem_cap * 0.55)       # total per-block footprint target
    vmem_limit = int(vmem_cap * 0.75)   # scoped-VMEM limit handed to Mosaic

    wr = _bilinear_matrix_np(new_res, H)   # (new_res, H)
    wc = _bilinear_matrix_np(new_res, W)   # (new_res, W)

    kron_bytes = H * W * OP * w_itemsize
    use_kron = (H <= 64 and W <= 64 and kron_bytes <= 4 * 1024 * 1024)
    if force_path == "kron":
        use_kron = True
    elif force_path == "separable":
        use_kron = False

    if use_kron:
        # ---- small-image path: single matmul against the Kronecker operator -------------
        HW = H * W
        kmat = jnp.asarray(np.kron(wr, wc).T, dtype=w_dtype)       # (H*W, new_res^2)
        x2d = x.reshape(N, HW)
        per_img = (2 * _round_up(HW, 128) * itemsize                # double-buffered input
                   + 3 * _round_up(OP, 128) * 4)                    # f32 acc + dbuf output
        fixed = 2 * _round_up(HW, 8) * _round_up(OP, 128) * w_itemsize
        T = _choose_block_images(N, per_img, fixed, budget, block_images)
        n_blocks = N // T
        flops = 2 * N * HW * OP
        bytes_accessed = N * HW * itemsize + N * OP * 4 + HW * OP * w_itemsize
        out2d = pl.pallas_call(
            _kron_kernel,
            out_shape=jax.ShapeDtypeStruct((N, OP), jnp.float32),
            grid=(n_blocks,),
            in_specs=[pl.BlockSpec((T, HW), lambda n: (n, 0)),
                      pl.BlockSpec((HW, OP), lambda n: (0, 0))],
            out_specs=pl.BlockSpec((T, OP), lambda n: (n, 0)),
            compiler_params=pltpu.CompilerParams(
                dimension_semantics=("parallel",),
                vmem_limit_bytes=vmem_limit),
            cost_estimate=pl.CostEstimate(
                flops=flops, transcendentals=0, bytes_accessed=bytes_accessed),
        )(x2d, kmat)
    else:
        # ---- large-image path: separable two-pass matmuls --------------------------------
        wct = jnp.asarray(wc.T, dtype=w_dtype)   # (W, new_res)
        wrt = jnp.asarray(wr.T, dtype=w_dtype)   # (H, new_res)
        x3d = x.reshape(N, H, W)
        per_img = (2 * _round_up(H, 8) * _round_up(W, 128) * itemsize        # input (dbuf)
                   + _round_up(H, 8) * _round_up(new_res, 128) * 4           # width-pass tmp
                   + _round_up(new_res, 8) * _round_up(H, 128) * 4           # transposed tmp
                   + 2 * _round_up(new_res, 8) * _round_up(new_res, 128) * 4 # pre/post swap
                   + 3 * _round_up(OP, 128) * 4)                             # flat + dbuf out
        fixed = 2 * (_round_up(W, 8) + _round_up(H, 8)) * _round_up(new_res, 128) * w_itemsize
        T = _choose_block_images(N, per_img, fixed, budget, block_images)
        n_blocks = N // T
        flops = 2 * N * new_res * (H * W + new_res * H)
        bytes_accessed = (N * H * W * itemsize + N * OP * 4
                          + (W + H) * new_res * w_itemsize)
        out2d = pl.pallas_call(
            _separable_kernel,
            out_shape=jax.ShapeDtypeStruct((N, OP), jnp.float32),
            grid=(n_blocks,),
            in_specs=[pl.BlockSpec((T, H, W), lambda n: (n, 0, 0)),
                      pl.BlockSpec((W, new_res), lambda n: (0, 0)),
                      pl.BlockSpec((H, new_res), lambda n: (0, 0))],
            out_specs=pl.BlockSpec((T, OP), lambda n: (n, 0)),
            compiler_params=pltpu.CompilerParams(
                dimension_semantics=("parallel",),
                vmem_limit_bytes=vmem_limit),
            cost_estimate=pl.CostEstimate(
                flops=flops, transcendentals=0, bytes_accessed=bytes_accessed),
        )(x3d, wct, wrt)

    out = out2d.reshape(B, C, new_res, new_res)
    return out, None


# ----------------------------------------------------------------------------- self-test

def _reference(x, res_scaler):
    B, C, H, W = x.shape
    new_res = W // res_scaler
    wr = _bilinear_matrix_np(new_res, H).astype(np.float64)
    wc = _bilinear_matrix_np(new_res, W).astype(np.float64)
    xn = np.asarray(x, dtype=np.float64).reshape(B * C, H, W)
    out = np.einsum("oh,nhw,pw->nop", wr, xn, wc, optimize=True)
    return out.reshape(B, C, new_res, new_res).astype(np.float32)


if __name__ == "__main__":
    key = jax.random.PRNGKey(0)

    # Small shape consistent with the module (Kronecker single-matmul path).
    B, C, H, W = 2, 4, 16, 16
    res_scaler = 2
    x = jax.random.normal(key, (B, C, H, W), dtype=jnp.float32)
    out, extra = numerical_downsampling(x, res_scaler)
    out = jax.block_until_ready(out)
    assert extra is None
    assert out.shape == (B, C, W // res_scaler, W // res_scaler)
    assert out.dtype == jnp.float32
    np.testing.assert_allclose(np.asarray(out), _reference(x, res_scaler),
                               rtol=1e-5, atol=1e-5)

    # Larger shape to exercise the separable two-matmul path as well.
    x2 = jax.random.normal(jax.random.PRNGKey(0), (2, 4, 128, 128), dtype=jnp.float32)
    out2, _ = numerical_downsampling(x2, 2)
    out2 = jax.block_until_ready(out2)
    np.testing.assert_allclose(np.asarray(out2), _reference(x2, 2),
                               rtol=1e-5, atol=2e-5)

    print("KERNEL_OK")
</pallas_src>

<mosaic_0001>
module attributes {stable_mosaic.version = 11 : i64} {
  func.func @_kron_kernel(%arg0: i32, %arg1: memref<8x256xf32, #tpu.memory_space<vmem>>, %arg2: memref<256x64xf32, #tpu.memory_space<vmem>>, %arg3: memref<8x64xf32, #tpu.memory_space<vmem>>) attributes {dimension_semantics = [#tpu.dimension_semantics<parallel>], iteration_bounds = array<i64: 1>, scalar_prefetch = 0 : i64, scratch_operands = 0 : i64, tpu.core_type = #tpu.core_type<tc>, window_params = [{transform_indices = @transform_0, window_bounds = array<i64: 8, 256>}, {pipeline_mode = #tpu.pipeline_mode<synchronous>, transform_indices = @transform_1, window_bounds = array<i64: 256, 64>}, {transform_indices = @transform_2, window_bounds = array<i64: 8, 64>}]} {
    %c0 = arith.constant 0 : index
    %c0_0 = arith.constant 0 : index
    %0 = vector.load %arg1[%c0, %c0_0] : memref<8x256xf32, #tpu.memory_space<vmem>>, vector<8x256xf32>
    %c0_1 = arith.constant 0 : index
    %c0_2 = arith.constant 0 : index
    %1 = vector.load %arg2[%c0_1, %c0_2] : memref<256x64xf32, #tpu.memory_space<vmem>>, vector<256x64xf32>
    %cst = arith.constant dense<0.000000e+00> : vector<8x64xf32>
    %2 = tpu.matmul %0, %1, %cst {dimension_numbers = #tpu.dot_dimension_numbers<[1], [0], [0], [1], [0, 0, 1, 1], [], []>} : vector<8x256xf32>, vector<256x64xf32>, vector<8x64xf32> -> vector<8x64xf32>
    %c0_3 = arith.constant 0 : index
    %c0_4 = arith.constant 0 : index
    %3 = vector.load %arg3[%c0_3, %c0_4] : memref<8x64xf32, #tpu.memory_space<vmem>>, vector<8x64xf32>
    tpu.vector_store %arg3[%c0_3, %c0_4], %2 {strides = array<i32>} : memref<8x64xf32, #tpu.memory_space<vmem>>, vector<8x64xf32>,
    return
  }
  func.func @transform_0(%arg0: i32) -> (i32, i32) {
    %c0_i32 = arith.constant 0 : i32
    %c0_i32_0 = arith.constant 0 : i32
    return %arg0, %c0_i32 : i32, i32
  }
  func.func @transform_1(%arg0: i32) -> (i32, i32) {
    %c0_i32 = arith.constant 0 : i32
    %c0_i32_0 = arith.constant 0 : i32
    %c0_i32_1 = arith.constant 0 : i32
    return %c0_i32, %c0_i32_0 : i32, i32
  }
  func.func @transform_2(%arg0: i32) -> (i32, i32) {
    %c0_i32 = arith.constant 0 : i32
    %c0_i32_0 = arith.constant 0 : i32
    return %arg0, %c0_i32 : i32, i32
  }
}

</mosaic_0001>

<llo_original>
// kernel: tpu_custom_call.1
$region0: #{tpu_custom_call.1}
  #allocation0 [shape = 'u32[]', space=smem, size = 0x4, offset = 0x4, fixed_abs, tag = 'smem constant byte address 0x4 - core index']
  #allocation1 [shape = 'u32[144,128]{1,0:T(1,128)}', space=vmem, size = 0x12000, scoped, tag = 'internal scratch']
  %s0 = inlined_call_operand.vmem [shape: f32[8,256], index: 0, kind: input, shape index: {}]
  %s1 = inlined_call_operand.vmem [shape: f32[256,64], index: 1, kind: input, shape index: {}]
  %s2 = inlined_call_operand.hbm [shape: f32[8,64], index: 2, kind: output, shape index: {}]
  %s3 = sld [smem:[#allocation0]]
  $region18: #{tpu_custom_call.1} parent=0
    _
  %s5 = ssub.s32 1, %s3
  %s6 = scalar_select 0, %s5, %s3
  $region1: #{tpu_custom_call.1} parent=0
    #allocation2 [shape = 'u8[4096]{0}', space=vmem, size = 0x1000, scoped, tag = 'output window, operand 0, single buffered']
    #allocation3 [shape = 's32[1]{0}', space=sflag, size = 0x4, scoped, tag = 'scoped memory for tpu_custom_call.1']
    %7 = vsyncpa [#allocation3], 0
    // Predicated region
    $region2: #{tpu_custom_call.1} parent=1 // pred_check
      _
    $region3: #{tpu_custom_call.1} parent=1 // pred_check_branch
      %9 = sbr.rel (0) target = $region5
    $region4: #{tpu_custom_call.1} parent=1 // pred_region
      _
    $region5: #{tpu_custom_call.1} parent=1 // pred_fallthru
      _
    // Predicated region
    $region6: #{tpu_custom_call.1} parent=1 // pred_check
      _
    $region7: #{tpu_custom_call.1} parent=1 // pred_check_branch
      %11 = sbr.rel (0) target = $region9
    $region8: #{tpu_custom_call.1} parent=1 // pred_region
      _
    $region9: #{tpu_custom_call.1} parent=1 // pred_fallthru
      _
    %v12 = vld [vmem:[%s0] sm:$0xff]
    %v13 = vld [vmem:[%s0 + $0x8] sm:$0xff]
    %v14 = vld [vmem:[%s1] sm:$0xff]
    %v15 = vld [vmem:[%s1 + $0x8] sm:$0xff]
    %v16 = vld [vmem:[%s1 + $0x10] sm:$0xff]
    %v17 = vld [vmem:[%s1 + $0x18] sm:$0xff]
    %v18 = vld [vmem:[%s1 + $0x20] sm:$0xff]
    %v19 = vld [vmem:[%s1 + $0x28] sm:$0xff]
    %v20 = vld [vmem:[%s1 + $0x30] sm:$0xff]
    %v21 = vld [vmem:[%s1 + $0x38] sm:$0xff]
    %v22 = vld [vmem:[%s1 + $0x40] sm:$0xff]
    %v23 = vld [vmem:[%s1 + $0x48] sm:$0xff]
    %v24 = vld [vmem:[%s1 + $0x50] sm:$0xff]
    %v25 = vld [vmem:[%s1 + $0x58] sm:$0xff]
    %v26 = vld [vmem:[%s1 + $0x60] sm:$0xff]
    %v27 = vld [vmem:[%s1 + $0x68] sm:$0xff]
    %v28 = vld [vmem:[%s1 + $0x70] sm:$0xff]
    %v29 = vld [vmem:[%s1 + $0x78] sm:$0xff]
    %v30 = vld [vmem:[%s1 + $0x80] sm:$0xff]
    %v31 = vld [vmem:[%s1 + $0x88] sm:$0xff]
    %v32 = vld [vmem:[%s1 + $0x90] sm:$0xff]
    %v33 = vld [vmem:[%s1 + $0x98] sm:$0xff]
    %v34 = vld [vmem:[%s1 + $0xa0] sm:$0xff]
    %v35 = vld [vmem:[%s1 + $0xa8] sm:$0xff]
    %v36 = vld [vmem:[%s1 + $0xb0] sm:$0xff]
    %v37 = vld [vmem:[%s1 + $0xb8] sm:$0xff]
    %v38 = vld [vmem:[%s1 + $0xc0] sm:$0xff]
    %v39 = vld [vmem:[%s1 + $0xc8] sm:$0xff]
    %v40 = vld [vmem:[%s1 + $0xd0] sm:$0xff]
    %v41 = vld [vmem:[%s1 + $0xd8] sm:$0xff]
    %v42 = vld [vmem:[%s1 + $0xe0] sm:$0xff]
    %v43 = vld [vmem:[%s1 + $0xe8] sm:$0xff]
    %v44 = vld [vmem:[%s1 + $0xf0] sm:$0xff]
    %v45 = vld [vmem:[%s1 + $0xf8] sm:$0xff]
    %46 = vmatprep.subr.mxu0 0.0
    %47 = vmatpush1.msra.mxu0 %v14
    %48 = vmatprep.subr.mxu0 0.0
    %49 = vmatpush1.msra.mxu0 %v15
    %50 = vmatprep.subr.mxu0 0.0
    %51 = vmatpush1.msra.mxu0 %v16
    %52 = vmatprep.subr.mxu0 0.0
    %53 = vmatpush1.msra.mxu0 %v17
    %54 = vmatprep.subr.mxu0 0.0
    %55 = vmatpush1.msra.mxu0 %v18
    %56 = vmatprep.subr.mxu0 0.0
    %57 = vmatpush1.msra.mxu0 %v19
    %58 = vmatprep.subr.mxu0 0.0
    %59 = vmatpush1.msra.mxu0 %v20
    %60 = vmatprep.subr.mxu0 0.0
    %61 = vmatpush1.msra.mxu0 %v21
    %62 = vmatprep.subr.mxu0 0.0
    %63 = vmatpush1.msra.mxu0 %v22
    %64 = vmatprep.subr.mxu0 0.0
    %65 = vmatpush1.msra.mxu0 %v23
    %66 = vmatprep.subr.mxu0 0.0
    %67 = vmatpush1.msra.mxu0 %v24
    %68 = vmatprep.subr.mxu0 0.0
    %69 = vmatpush1.msra.mxu0 %v25
    %70 = vmatprep.subr.mxu0 0.0
    %71 = vmatpush1.msra.mxu0 %v26
    %72 = vmatprep.subr.mxu0 0.0
    %73 = vmatpush1.msra.mxu0 %v27
    %74 = vmatprep.subr.mxu0 0.0
    %75 = vmatpush1.msra.mxu0 %v28
    %76 = vmatprep.subr.mxu0 0.0
    %77 = vmatpush1.msra.mxu0 %v29
    %78 = vmatprep.subr.mxu0 0.0
    %79 = vmatpush1.msra.mxu0 %v30
    %80 = vmatprep.subr.mxu0 0.0
    %81 = vmatpush1.msra.mxu0 %v31
    %82 = vmatprep.subr.mxu0 0.0
    %83 = vmatpush1.msra.mxu0 %v32
    %84 = vmatprep.subr.mxu0 0.0
    %85 = vmatpush1.msra.mxu0 %v33
    %86 = vmatprep.subr.mxu0 0.0
    %87 = vmatpush1.msra.mxu0 %v34
    %88 = vmatprep.subr.mxu0 0.0
    %89 = vmatpush1.msra.mxu0 %v35
    %90 = vmatprep.subr.mxu0 0.0
    %91 = vmatpush1.msra.mxu0 %v36
    %92 = vmatprep.subr.mxu0 0.0
    %93 = vmatpush1.msra.mxu0 %v37
    %94 = vmatprep.subr.mxu0 0.0
    %95 = vmatpush1.msra.mxu0 %v38
    %96 = vmatprep.subr.mxu0 0.0
    %97 = vmatpush1.msra.mxu0 %v39
    %98 = vmatprep.subr.mxu0 0.0
    %99 = vmatpush1.msra.mxu0 %v40
    %100 = vmatprep.subr.mxu0 0.0
    %101 = vmatpush1.msra.mxu0 %v41
    %102 = vmatprep.subr.mxu0 0.0
    %103 = vmatpush1.msra.mxu0 %v42
    %104 = vmatprep.subr.mxu0 0.0
    %105 = vmatpush1.msra.mxu0 %v43
    %106 = vmatprep.subr.mxu0 0.0
    %107 = vmatpush1.msra.mxu0 %v44
    %108 = vmatprep.subr.mxu0 0.0
    %109 = vmatpush1.msra.mxu0 %v45
    %110 = vmatprep.mubr.f32.mxu0 %v13
    %111 = vmatmul.mubr.f32.gmra.mrb[0].mxu0 %v12
    %v112 = vpop.f32.mrb[0].mxu0
    %v113 = vadd.f32 0.0, %v112
    %v114 = vpop.f32.mrb[0].mxu0
    %115 = vdwg.mxu0
    %vm116 = vcmask 523264
    %117 = vst.msk [vmem:[#allocation2] sm:$0xff] %vm116, %v113
    // Predicated region
    $region10: #{tpu_custom_call.1} parent=1 // pred_check
      _
    $region11: #{tpu_custom_call.1} parent=1 // pred_check_branch
      %119 = sbr.rel (0) target = $region13
    $region12: #{tpu_custom_call.1} parent=1 // pred_region
      %s121 = ssub.s32 128, 128
      %122 = vsyncadd [#allocation3], %s121
      %s124 = sshll.u32 [#allocation2], 4
      %s125 = int_to_ptr.vmem [resolvable:$true] %s124
      %127 = dma.vmem_to_hbm [thread:$0]  %s125, 128, %s2, [#allocation3]
    $region13: #{tpu_custom_call.1} parent=1 // pred_fallthru
      _
    // Predicated region
    $region14: #{tpu_custom_call.1} parent=1 // pred_check
      _
    $region15: #{tpu_custom_call.1} parent=1 // pred_check_branch
      %129 = sbr.rel (0) target = $region17
    $region16: #{tpu_custom_call.1} parent=1 // pred_region
      %130 = dma.done [#allocation3], 128
    $region17: #{tpu_custom_call.1} parent=1 // pred_fallthru
      _
    %131 = vsyncpa [#allocation3], 1

</llo_original>
